<compile_context>
chip_gen: v5e
topology: v5e:2x2
jax: 0.10.0
libtpu: 0.0.40
codegen_flags: <defaults>
</compile_context>

<pallas_src>
import math
import functools

import jax
import jax.numpy as jnp
from jax.experimental import pallas as pl
from jax.experimental.pallas import tpu as pltpu


def _attention_kernel(x_ref, wqkv_t_ref, bqkv_ref, wproj_t_ref, bproj_ref,
                      o_ref, *, num_heads: int):
    """One batch element per grid step.

    x_ref       : (1, L, C)   activations (kept in input dtype)
    wqkv_t_ref  : (C, 3C)     pre-transposed qkv weight (x @ Wt == x @ W.T)
    bqkv_ref    : (1, 3C)
    wproj_t_ref : (C, C)      pre-transposed proj weight
    bproj_ref   : (1, C)
    o_ref       : (1, L, C)
    """
    x = x_ref[0]                                  # (L, C), input dtype for MXU
    L, C = x.shape
    H = num_heads
    dh = C // H
    scale = 1.0 / math.sqrt(dh)
    dt = x.dtype

    # --- QKV projection: one full-width MXU matmul, f32 accumulation.
    qkv = jnp.dot(x, wqkv_t_ref[...], preferred_element_type=jnp.float32)
    qkv = qkv + bqkv_ref[...].astype(jnp.float32)           # (L, 3C) f32

    # --- Split heads (static lane slices, PyTorch 3C layout = [3, H, dh]) and
    #     stack into single batched (H, L, dh) operands so attention is two
    #     batched contractions rather than a per-head python loop of matmuls.
    q = jnp.stack([qkv[:, h * dh:(h + 1) * dh] for h in range(H)], axis=0)
    k = jnp.stack([qkv[:, C + h * dh:C + (h + 1) * dh] for h in range(H)],
                  axis=0)
    v = jnp.stack([qkv[:, 2 * C + h * dh:2 * C + (h + 1) * dh]
                   for h in range(H)], axis=0)
    q = (q * scale).astype(dt)                    # fold softmax scale into q
    k = k.astype(dt)
    v = v.astype(dt)

    # --- Scaled dot-product attention, all heads batched; softmax in f32.
    # TODO(synk): for long sequences, tile the KV axis (flash-style online
    # softmax with an "arbitrary" KV grid axis) instead of materializing the
    # full (H, L, L) score matrix.
    s = jnp.einsum('hqd,hkd->hqk', q, k,
                   preferred_element_type=jnp.float32)       # (H, L, L) f32
    s = s - jnp.max(s, axis=-1, keepdims=True)
    p = jnp.exp(s)
    denom = jnp.sum(p, axis=-1, keepdims=True)
    p = p * pl.reciprocal(denom, approx=True)                # EUP, not VPU div
    o = jnp.einsum('hqk,hkd->hqd', p.astype(dt), v,
                   preferred_element_type=jnp.float32)       # (H, L, dh)

    # --- Concat heads back to (L, C) and run the output projection.
    attn = jnp.concatenate([o[h] for h in range(H)], axis=-1).astype(dt)
    out = jnp.dot(attn, wproj_t_ref[...], preferred_element_type=jnp.float32)
    out = out + bproj_ref[...].astype(jnp.float32)
    o_ref[0] = out.astype(o_ref.dtype)


def attention_pallas(x, wqkv, bqkv, wproj, bproj, num_heads):
    B, L, C = x.shape
    H = num_heads
    dh = C // H

    # Pre-transpose PyTorch (out, in) weights once, outside the kernel.
    wqkv_t = jnp.transpose(wqkv)            # (C, 3C)
    wproj_t = jnp.transpose(wproj)          # (C, C)
    bqkv2 = bqkv.reshape(1, 3 * C)
    bproj2 = bproj.reshape(1, C)

    kernel = functools.partial(_attention_kernel, num_heads=num_heads)

    # Rough per-step VMEM footprint (double-buffered blocks + weight slabs +
    # f32 intermediates); set the scoped-VMEM limit with ~2x headroom.
    act_sz = jnp.dtype(x.dtype).itemsize
    w_sz = jnp.dtype(wqkv.dtype).itemsize
    est = (
        2 * 2 * L * C * act_sz                       # x / out blocks (dbl-buf)
        + 2 * (3 * C * C + C * C + 4 * C) * w_sz     # weight + bias slabs
        + L * 3 * C * 4                              # qkv (f32)
        + 3 * H * L * dh * act_sz                    # stacked q, k, v
        + 2 * H * L * L * 4                          # scores + probs (f32)
        + 2 * L * C * 4                              # attn out + proj acc
    )
    vmem_limit = int(max(2 * est, 32 * 1024 * 1024))

    return pl.pallas_call(
        kernel,
        out_shape=jax.ShapeDtypeStruct((B, L, C), x.dtype),
        grid_spec=pltpu.PrefetchScalarGridSpec(
            num_scalar_prefetch=0,
            grid=(B,),   # one batch element per step; parallel => megacore/v7x
            in_specs=[
                pl.BlockSpec((1, L, C), lambda b: (b, 0, 0)),
                pl.BlockSpec((C, 3 * C), lambda b: (0, 0)),
                pl.BlockSpec((1, 3 * C), lambda b: (0, 0)),
                pl.BlockSpec((C, C), lambda b: (0, 0)),
                pl.BlockSpec((1, C), lambda b: (0, 0)),
            ],
            out_specs=pl.BlockSpec((1, L, C), lambda b: (b, 0, 0)),
        ),
        compiler_params=pltpu.CompilerParams(
            dimension_semantics=("parallel",),
            vmem_limit_bytes=vmem_limit,
        ),
    )(x, wqkv_t, bqkv2, wproj_t, bproj2)


def attention_reference(x, wqkv, bqkv, wproj, bproj, num_heads):
    """Pure-JAX reference mirroring the PyTorch module's forward."""
    B, L, C = x.shape
    dh = C // num_heads
    qkv = x @ wqkv.T + bqkv                                # (B, L, 3C)
    qkv = qkv.reshape(B, L, 3, num_heads, dh)
    q = jnp.transpose(qkv[:, :, 0], (0, 2, 1, 3))          # (B, H, L, dh)
    k = jnp.transpose(qkv[:, :, 1], (0, 2, 1, 3))
    v = jnp.transpose(qkv[:, :, 2], (0, 2, 1, 3))
    s = jnp.einsum("bhqd,bhkd->bhqk", q, k) / math.sqrt(dh)
    p = jax.nn.softmax(s, axis=-1)
    o = jnp.einsum("bhqk,bhkd->bhqd", p, v)                # (B, H, L, dh)
    o = jnp.transpose(o, (0, 2, 1, 3)).reshape(B, L, C)
    return o @ wproj.T + bproj


if __name__ == "__main__":
    # Small shapes consistent with the module: B=2, L=8 (seq), C=32 (dim), 4 heads.
    B, L, C, H = 2, 8, 32, 4

    key = jax.random.PRNGKey(0)
    kx, kw1, kb1, kw2, kb2 = jax.random.split(key, 5)

    x = jax.random.normal(kx, (B, L, C), dtype=jnp.float32)
    # nn.Linear(dim, 3*dim, bias=qkv_bias) weights: (3C, C), bias (3C,)
    wqkv = jax.random.normal(kw1, (3 * C, C), dtype=jnp.float32) * 0.05
    bqkv = jax.random.normal(kb1, (3 * C,), dtype=jnp.float32) * 0.05
    # nn.Linear(dim, dim) weights: (C, C), bias (C,)
    wproj = jax.random.normal(kw2, (C, C), dtype=jnp.float32) * 0.05
    bproj = jax.random.normal(kb2, (C,), dtype=jnp.float32) * 0.05

    out = attention_pallas(x, wqkv, bqkv, wproj, bproj, H)
    out = jax.block_until_ready(out)

    ref = attention_reference(x, wqkv, bqkv, wproj, bproj, H)
    assert out.shape == (B, L, C)
    # Tolerance slightly relaxed vs 1e-4 because the softmax normalization uses
    # the EUP approximate reciprocal.
    assert jnp.allclose(out, ref, atol=2e-3, rtol=2e-3), "mismatch vs reference"

    print("KERNEL_OK")
</pallas_src>

<mosaic_0001>
module attributes {stable_mosaic.version = 11 : i64} {
  func.func @_attention_kernel(%arg0: i32, %arg1: memref<1x8x32xf32, #tpu.memory_space<vmem>>, %arg2: memref<32x96xf32, #tpu.memory_space<vmem>>, %arg3: memref<1x96xf32, #tpu.memory_space<vmem>>, %arg4: memref<32x32xf32, #tpu.memory_space<vmem>>, %arg5: memref<1x32xf32, #tpu.memory_space<vmem>>, %arg6: memref<1x8x32xf32, #tpu.memory_space<vmem>>) attributes {dimension_semantics = [#tpu.dimension_semantics<parallel>], iteration_bounds = array<i64: 2>, scalar_prefetch = 0 : i64, scratch_operands = 0 : i64, tpu.core_type = #tpu.core_type<tc>, window_params = [{transform_indices = @transform_0, window_bounds = array<i64: 1, 8, 32>}, {pipeline_mode = #tpu.pipeline_mode<synchronous>, transform_indices = @transform_1, window_bounds = array<i64: 32, 96>}, {pipeline_mode = #tpu.pipeline_mode<synchronous>, transform_indices = @transform_2, window_bounds = array<i64: 1, 96>}, {pipeline_mode = #tpu.pipeline_mode<synchronous>, transform_indices = @transform_3, window_bounds = array<i64: 32, 32>}, {pipeline_mode = #tpu.pipeline_mode<synchronous>, transform_indices = @transform_4, window_bounds = array<i64: 1, 32>}, {transform_indices = @transform_5, window_bounds = array<i64: 1, 8, 32>}]} {
    %c0 = arith.constant 0 : index
    %c0_0 = arith.constant 0 : index
    %c0_1 = arith.constant 0 : index
    %0 = vector.load %arg1[%c0, %c0_0, %c0_1] : memref<1x8x32xf32, #tpu.memory_space<vmem>>, vector<1x8x32xf32>
    %1 = vector.shape_cast %0 : vector<1x8x32xf32> to vector<8x32xf32>
    %c0_2 = arith.constant 0 : index
    %c0_3 = arith.constant 0 : index
    %2 = vector.load %arg2[%c0_2, %c0_3] : memref<32x96xf32, #tpu.memory_space<vmem>>, vector<32x96xf32>
    %cst = arith.constant dense<0.000000e+00> : vector<8x96xf32>
    %3 = tpu.matmul %1, %2, %cst {dimension_numbers = #tpu.dot_dimension_numbers<[1], [0], [0], [1], [0, 0, 1, 1], [], []>} : vector<8x32xf32>, vector<32x96xf32>, vector<8x96xf32> -> vector<8x96xf32>
    %c0_4 = arith.constant 0 : index
    %c0_5 = arith.constant 0 : index
    %4 = vector.load %arg3[%c0_4, %c0_5] : memref<1x96xf32, #tpu.memory_space<vmem>>, vector<1x96xf32>
    %5 = vector.broadcast %4 : vector<1x96xf32> to vector<8x96xf32>
    %6 = arith.addf %3, %5 : vector<8x96xf32>
    %7 = vector.extract_strided_slice %6 {offsets = [0, 0], sizes = [8, 8], strides = [1, 1]} : vector<8x96xf32> to vector<8x8xf32>
    %8 = vector.extract_strided_slice %6 {offsets = [0, 8], sizes = [8, 8], strides = [1, 1]} : vector<8x96xf32> to vector<8x8xf32>
    %9 = vector.extract_strided_slice %6 {offsets = [0, 16], sizes = [8, 8], strides = [1, 1]} : vector<8x96xf32> to vector<8x8xf32>
    %10 = vector.extract_strided_slice %6 {offsets = [0, 24], sizes = [8, 8], strides = [1, 1]} : vector<8x96xf32> to vector<8x8xf32>
    %11 = vector.shape_cast %7 : vector<8x8xf32> to vector<1x8x8xf32>
    %12 = vector.shape_cast %8 : vector<8x8xf32> to vector<1x8x8xf32>
    %13 = vector.shape_cast %9 : vector<8x8xf32> to vector<1x8x8xf32>
    %14 = vector.shape_cast %10 : vector<8x8xf32> to vector<1x8x8xf32>
    %15 = tpu.concatenate %11, %12, %13, %14 in 0 : vector<1x8x8xf32>, vector<1x8x8xf32>, vector<1x8x8xf32>, vector<1x8x8xf32> -> vector<4x8x8xf32>
    %16 = vector.extract_strided_slice %6 {offsets = [0, 32], sizes = [8, 8], strides = [1, 1]} : vector<8x96xf32> to vector<8x8xf32>
    %17 = vector.extract_strided_slice %6 {offsets = [0, 40], sizes = [8, 8], strides = [1, 1]} : vector<8x96xf32> to vector<8x8xf32>
    %18 = vector.extract_strided_slice %6 {offsets = [0, 48], sizes = [8, 8], strides = [1, 1]} : vector<8x96xf32> to vector<8x8xf32>
    %19 = vector.extract_strided_slice %6 {offsets = [0, 56], sizes = [8, 8], strides = [1, 1]} : vector<8x96xf32> to vector<8x8xf32>
    %20 = vector.shape_cast %16 : vector<8x8xf32> to vector<1x8x8xf32>
    %21 = vector.shape_cast %17 : vector<8x8xf32> to vector<1x8x8xf32>
    %22 = vector.shape_cast %18 : vector<8x8xf32> to vector<1x8x8xf32>
    %23 = vector.shape_cast %19 : vector<8x8xf32> to vector<1x8x8xf32>
    %24 = tpu.concatenate %20, %21, %22, %23 in 0 : vector<1x8x8xf32>, vector<1x8x8xf32>, vector<1x8x8xf32>, vector<1x8x8xf32> -> vector<4x8x8xf32>
    %25 = vector.extract_strided_slice %6 {offsets = [0, 64], sizes = [8, 8], strides = [1, 1]} : vector<8x96xf32> to vector<8x8xf32>
    %26 = vector.extract_strided_slice %6 {offsets = [0, 72], sizes = [8, 8], strides = [1, 1]} : vector<8x96xf32> to vector<8x8xf32>
    %27 = vector.extract_strided_slice %6 {offsets = [0, 80], sizes = [8, 8], strides = [1, 1]} : vector<8x96xf32> to vector<8x8xf32>
    %28 = vector.extract_strided_slice %6 {offsets = [0, 88], sizes = [8, 8], strides = [1, 1]} : vector<8x96xf32> to vector<8x8xf32>
    %29 = vector.shape_cast %25 : vector<8x8xf32> to vector<1x8x8xf32>
    %30 = vector.shape_cast %26 : vector<8x8xf32> to vector<1x8x8xf32>
    %31 = vector.shape_cast %27 : vector<8x8xf32> to vector<1x8x8xf32>
    %32 = vector.shape_cast %28 : vector<8x8xf32> to vector<1x8x8xf32>
    %33 = tpu.concatenate %29, %30, %31, %32 in 0 : vector<1x8x8xf32>, vector<1x8x8xf32>, vector<1x8x8xf32>, vector<1x8x8xf32> -> vector<4x8x8xf32>
    %cst_6 = arith.constant 0.353553385 : f32
    %34 = vector.broadcast %cst_6 : f32 to vector<4x8x8xf32>
    %35 = arith.mulf %15, %34 : vector<4x8x8xf32>
    "tpu.trace_start"() <{level = 10 : i32, message = "hqd,hkd->hqk"}> : () -> ()
    %cst_7 = arith.constant dense<0.000000e+00> : vector<4x8x8xf32>
    %36 = tpu.matmul %35, %24, %cst_7 {dimension_numbers = #tpu.dot_dimension_numbers<[2], [2], [1], [1], [0, 0, 0, 1, 1, 1], [0], [0]>} : vector<4x8x8xf32>, vector<4x8x8xf32>, vector<4x8x8xf32> -> vector<4x8x8xf32>
    "tpu.trace_stop"() : () -> ()
    %cst_8 = arith.constant dense<0xFF800000> : vector<4x8xf32>
    %37 = vector.multi_reduction <maximumf>, %36, %cst_8 [2] : vector<4x8x8xf32> to vector<4x8xf32>
    %38 = vector.shape_cast %37 : vector<4x8xf32> to vector<4x8x1xf32>
    %39 = vector.broadcast %38 : vector<4x8x1xf32> to vector<4x8x8xf32>
    %40 = arith.subf %36, %39 : vector<4x8x8xf32>
    %41 = math.exp %40 : vector<4x8x8xf32>
    %cst_9 = arith.constant dense<0.000000e+00> : vector<4x8xf32>
    %42 = vector.multi_reduction <add>, %41, %cst_9 [2] : vector<4x8x8xf32> to vector<4x8xf32>
    %43 = vector.shape_cast %42 : vector<4x8xf32> to vector<4x8x1xf32>
    %44 = tpu.reciprocal %43 {approx = true} : vector<4x8x1xf32> -> vector<4x8x1xf32>
    %45 = vector.broadcast %44 : vector<4x8x1xf32> to vector<4x8x8xf32>
    %46 = arith.mulf %41, %45 : vector<4x8x8xf32>
    "tpu.trace_start"() <{level = 10 : i32, message = "hqk,hkd->hqd"}> : () -> ()
    %cst_10 = arith.constant dense<0.000000e+00> : vector<4x8x8xf32>
    %47 = tpu.matmul %46, %33, %cst_10 {dimension_numbers = #tpu.dot_dimension_numbers<[2], [1], [1], [2], [0, 0, 0, 1, 1, 2], [0], [0]>} : vector<4x8x8xf32>, vector<4x8x8xf32>, vector<4x8x8xf32> -> vector<4x8x8xf32>
    "tpu.trace_stop"() : () -> ()
    %48 = vector.extract_strided_slice %47 {offsets = [0, 0, 0], sizes = [1, 8, 8], strides = [1, 1, 1]} : vector<4x8x8xf32> to vector<1x8x8xf32>
    %49 = vector.shape_cast %48 : vector<1x8x8xf32> to vector<8x8xf32>
    %50 = vector.extract_strided_slice %47 {offsets = [1, 0, 0], sizes = [1, 8, 8], strides = [1, 1, 1]} : vector<4x8x8xf32> to vector<1x8x8xf32>
    %51 = vector.shape_cast %50 : vector<1x8x8xf32> to vector<8x8xf32>
    %52 = vector.extract_strided_slice %47 {offsets = [2, 0, 0], sizes = [1, 8, 8], strides = [1, 1, 1]} : vector<4x8x8xf32> to vector<1x8x8xf32>
    %53 = vector.shape_cast %52 : vector<1x8x8xf32> to vector<8x8xf32>
    %54 = vector.extract_strided_slice %47 {offsets = [3, 0, 0], sizes = [1, 8, 8], strides = [1, 1, 1]} : vector<4x8x8xf32> to vector<1x8x8xf32>
    %55 = vector.shape_cast %54 : vector<1x8x8xf32> to vector<8x8xf32>
    %56 = tpu.concatenate %49, %51, %53, %55 in 1 : vector<8x8xf32>, vector<8x8xf32>, vector<8x8xf32>, vector<8x8xf32> -> vector<8x32xf32>
    %c0_11 = arith.constant 0 : index
    %c0_12 = arith.constant 0 : index
    %57 = vector.load %arg4[%c0_11, %c0_12] : memref<32x32xf32, #tpu.memory_space<vmem>>, vector<32x32xf32>
    %cst_13 = arith.constant dense<0.000000e+00> : vector<8x32xf32>
    %58 = tpu.matmul %56, %57, %cst_13 {dimension_numbers = #tpu.dot_dimension_numbers<[1], [0], [0], [1], [0, 0, 1, 1], [], []>} : vector<8x32xf32>, vector<32x32xf32>, vector<8x32xf32> -> vector<8x32xf32>
    %c0_14 = arith.constant 0 : index
    %c0_15 = arith.constant 0 : index
    %59 = vector.load %arg5[%c0_14, %c0_15] : memref<1x32xf32, #tpu.memory_space<vmem>>, vector<1x32xf32>
    %60 = vector.broadcast %59 : vector<1x32xf32> to vector<8x32xf32>
    %61 = arith.addf %58, %60 : vector<8x32xf32>
    %c0_16 = arith.constant 0 : index
    %c0_17 = arith.constant 0 : index
    %c0_18 = arith.constant 0 : index
    %62 = vector.load %arg6[%c0_16, %c0_17, %c0_18] : memref<1x8x32xf32, #tpu.memory_space<vmem>>, vector<1x8x32xf32>
    %63 = vector.shape_cast %62 : vector<1x8x32xf32> to vector<8x32xf32>
    %64 = vector.shape_cast %61 : vector<8x32xf32> to vector<1x8x32xf32>
    tpu.vector_store %arg6[%c0_16, %c0_17, %c0_18], %64 {strides = array<i32>} : memref<1x8x32xf32, #tpu.memory_space<vmem>>, vector<1x8x32xf32>,
    return
  }
  func.func @transform_0(%arg0: i32) -> (i32, i32, i32) {
    %c0_i32 = arith.constant 0 : i32
    %c0_i32_0 = arith.constant 0 : i32
    %c0_i32_1 = arith.constant 0 : i32
    return %arg0, %c0_i32, %c0_i32_0 : i32, i32, i32
  }
  func.func @transform_1(%arg0: i32) -> (i32, i32) {
    %c0_i32 = arith.constant 0 : i32
    %c0_i32_0 = arith.constant 0 : i32
    %c0_i32_1 = arith.constant 0 : i32
    return %c0_i32, %c0_i32_0 : i32, i32
  }
  func.func @transform_2(%arg0: i32) -> (i32, i32) {
    %c0_i32 = arith.constant 0 : i32
    %c0_i32_0 = arith.constant 0 : i32
    %c0_i32_1 = arith.constant 0 : i32
    return %c0_i32, %c0_i32_0 : i32, i32
  }
  func.func @transform_3(%arg0: i32) -> (i32, i32) {
    %c0_i32 = arith.constant 0 : i32
    %c0_i32_0 = arith.constant 0 : i32
    %c0_i32_1 = arith.constant 0 : i32
    return %c0_i32, %c0_i32_0 : i32, i32
  }
  func.func @transform_4(%arg0: i32) -> (i32, i32) {
    %c0_i32 = arith.constant 0 : i32
    %c0_i32_0 = arith.constant 0 : i32
    %c0_i32_1 = arith.constant 0 : i32
    return %c0_i32, %c0_i32_0 : i32, i32
  }
  func.func @transform_5(%arg0: i32) -> (i32, i32, i32) {
    %c0_i32 = arith.constant 0 : i32
    %c0_i32_0 = arith.constant 0 : i32
    %c0_i32_1 = arith.constant 0 : i32
    return %arg0, %c0_i32, %c0_i32_0 : i32, i32, i32
  }
}

</mosaic_0001>

<llo_original>
// kernel: tpu_custom_call.1
$region0: #{tpu_custom_call.1}
  #allocation0 [shape = 'u32[]', space=smem, size = 0x4, offset = 0x4, fixed_abs, tag = 'smem constant byte address 0x4 - core index']
  #allocation1 [shape = 'u32[72,128]{1,0:T(1,128)}', space=vmem, size = 0x9000, scoped, tag = 'internal scratch']
  %s0 = inlined_call_operand.hbm [shape: f32[2,8,32], index: 0, kind: input, shape index: {}]
  %s1 = inlined_call_operand.hbm [shape: f32[32,96], index: 1, kind: input, shape index: {}]
  %s2 = inlined_call_operand.vmem [shape: f32[1,96], index: 2, kind: input, shape index: {}]
  %s3 = inlined_call_operand.hbm [shape: f32[32,32], index: 3, kind: input, shape index: {}]
  %s4 = inlined_call_operand.vmem [shape: f32[1,32], index: 4, kind: input, shape index: {}]
  %s5 = inlined_call_operand.hbm [shape: f32[2,8,32], index: 5, kind: output, shape index: {}]
  %s6 = sld [smem:[#allocation0]]
  $region65: #{tpu_custom_call.1} parent=0
    _
  %s8 = ssub.s32 1, %s6
  %s9 = scalar_select 0, %s8, %s6
  $region1: #{tpu_custom_call.1} parent=0
    #allocation2 [shape = 'u8[8192]{0}', space=vmem, size = 0x2000, scoped, tag = 'input window, operand 0']
    #allocation3 [shape = 's32[2]{0}', space=sflag, size = 0x8, scoped, tag = 'scoped memory for tpu_custom_call.1']
    #allocation4 [shape = 's32[2]{0}', space=sflag, size = 0x8, scoped, tag = 'scoped memory for tpu_custom_call.1']
    #allocation5 [shape = 'u8[16384]{0}', space=vmem, size = 0x4000, scoped, tag = 'input window, operand 1, single buffered']
    #allocation6 [shape = 's32[1]{0}', space=sflag, size = 0x4, scoped, tag = 'scoped memory for tpu_custom_call.1']
    #allocation7 [shape = 'u8[16384]{0}', space=vmem, size = 0x4000, scoped, tag = 'input window, operand 3, single buffered']
    #allocation8 [shape = 'u8[8192]{0}', space=vmem, size = 0x2000, scoped, tag = 'output window, operand 0']
    %10 = vsyncpa [#allocation3], 0
    %s11 = scalar_lea.sflag [#allocation3], 1
    %12 = vsyncpa %s11, 0
    %13 = vsyncpa [#allocation6], 0
    %14 = vsyncpa [#allocation4], 0
    %s15 = scalar_lea.sflag [#allocation4], 1
    %16 = vsyncpa %s15, 0
    loop: start=0, step=1, limit=4
    $region2: #{tpu_custom_call.1} parent=1 // loop_pre_header
      _
    $region3: #{tpu_custom_call.1} parent=1 // loop_header
      %s18 = sphi 0, %s22
      %p19 = scmp.ge.s32.totalorder %s18, 4
      %s28 = sphi 0, %s30
      %s31 = sphi 0, %s28
      %s32 = sphi 0, %s31
      %s48 = sphi 0, %s32
      %s52 = sphi 0, %s52
      %s54 = sphi 0, %s52
      %s55 = sphi 0, %s54
      %s69 = sphi 0, %s55
      %s73 = sphi 0, %s73
      %s75 = sphi 0, %s73
      %s76 = sphi 0, %s75
      %s90 = sphi 0, %s76
      %s94 = sphi 0, %s94
      %s96 = sphi 0, %s94
      %s97 = sphi 0, %s96
      %s111 = sphi 0, %s97
      %s115 = sphi 0, %s115
      %s117 = sphi 0, %s115
      %s118 = sphi 0, %s117
      %s132 = sphi 0, %s118
      %s138 = sphi 0, %s140
      %s141 = sphi 0, %s138
      %s142 = sphi 0, %s141
      %s158 = sphi 0, %s142
    $region4: #{tpu_custom_call.1} parent=1 // loop_header_branch
      %21 = sbr.rel (%p19) target = $region8
    $region5: #{tpu_custom_call.1} parent=1 // loop_body
      %s23 = ssub.s32 %s18, 1
      %s24 = ssub.s32 %s18, 2
      %s25 = sadd.s32 %s18, 1
      %s26 = ssub.s32 %s18, %s25
      %p27 = scmp.eq.s32.totalorder %s26, 0
      %s29 = sadd.s32 %s28, 1
      %s30 = scalar_select %p27, %s28, %s29
      %p33 = pneg %p27
      %p34 = scmp.eq.s32.totalorder %s18, 1
      %p35 = por %p33, %p34
      %p36 = scmp.ne.s32.totalorder %s28, %s31
      %p37 = scmp.eq.s32.totalorder %s18, 0
      %p38 = por %p36, %p37
      %p39 = scmp.ne.s32.totalorder %s28, %s31
      %p40 = scmp.eq.s32.totalorder %s23, 1
      %p41 = por %p39, %p40
      %p42 = scmp.ne.s32.totalorder %s31, %s32
      %p43 = scmp.eq.s32.totalorder %s23, 0
      %p44 = por %p42, %p43
      %p45 = scmp.ne.s32.totalorder %s31, %s32
      %p46 = scmp.eq.s32.totalorder %s24, 1
      %p47 = por %p45, %p46
      %p49 = scmp.ne.s32.totalorder %s32, %s48
      %p50 = scmp.eq.s32.totalorder %s24, 0
      %p51 = por %p49, %p50
      %s53 = sadd.s32 %s52, 1
      %p56 = scmp.eq.s32.totalorder %s18, 1
      %p57 = scmp.ne.s32.totalorder %s52, %s54
      %p58 = scmp.eq.s32.totalorder %s18, 0
      %p59 = por %p57, %p58
      %p60 = scmp.ne.s32.totalorder %s52, %s54
      %p61 = scmp.eq.s32.totalorder %s23, 1
      %p62 = por %p60, %p61
      %p63 = scmp.ne.s32.totalorder %s54, %s55
      %p64 = scmp.eq.s32.totalorder %s23, 0
      %p65 = por %p63, %p64
      %p66 = scmp.ne.s32.totalorder %s54, %s55
      %p67 = scmp.eq.s32.totalorder %s24, 1
      %p68 = por %p66, %p67
      %p70 = scmp.ne.s32.totalorder %s55, %s69
      %p71 = scmp.eq.s32.totalorder %s24, 0
      %p72 = por %p70, %p71
      %s74 = sadd.s32 %s73, 1
      %p77 = scmp.eq.s32.totalorder %s18, 1
      %p78 = scmp.ne.s32.totalorder %s73, %s75
      %p79 = scmp.eq.s32.totalorder %s18, 0
      %p80 = por %p78, %p79
      %p81 = scmp.ne.s32.totalorder %s73, %s75
      %p82 = scmp.eq.s32.totalorder %s23, 1
      %p83 = por %p81, %p82
      %p84 = scmp.ne.s32.totalorder %s75, %s76
      %p85 = scmp.eq.s32.totalorder %s23, 0
      %p86 = por %p84, %p85
      %p87 = scmp.ne.s32.totalorder %s75, %s76
      %p88 = scmp.eq.s32.totalorder %s24, 1
      %p89 = por %p87, %p88
      %p91 = scmp.ne.s32.totalorder %s76, %s90
      %p92 = scmp.eq.s32.totalorder %s24, 0
      %p93 = por %p91, %p92
      %s95 = sadd.s32 %s94, 1
      %p98 = scmp.eq.s32.totalorder %s18, 1
      %p99 = scmp.ne.s32.totalorder %s94, %s96
      %p100 = scmp.eq.s32.totalorder %s18, 0
      %p101 = por %p99, %p100
      %p102 = scmp.ne.s32.totalorder %s94, %s96
      %p103 = scmp.eq.s32.totalorder %s23, 1
      %p104 = por %p102, %p103
      %p105 = scmp.ne.s32.totalorder %s96, %s97
      %p106 = scmp.eq.s32.totalorder %s23, 0
      %p107 = por %p105, %p106
      %p108 = scmp.ne.s32.totalorder %s96, %s97
      %p109 = scmp.eq.s32.totalorder %s24, 1
      %p110 = por %p108, %p109
      %p112 = scmp.ne.s32.totalorder %s97, %s111
      %p113 = scmp.eq.s32.totalorder %s24, 0
      %p114 = por %p112, %p113
      %s116 = sadd.s32 %s115, 1
      %p119 = scmp.eq.s32.totalorder %s18, 1
      %p120 = scmp.ne.s32.totalorder %s115, %s117
      %p121 = scmp.eq.s32.totalorder %s18, 0
      %p122 = por %p120, %p121
      %p123 = scmp.ne.s32.totalorder %s115, %s117
      %p124 = scmp.eq.s32.totalorder %s23, 1
      %p125 = por %p123, %p124
      %p126 = scmp.ne.s32.totalorder %s117, %s118
      %p127 = scmp.eq.s32.totalorder %s23, 0
      %p128 = por %p126, %p127
      %p129 = scmp.ne.s32.totalorder %s117, %s118
      %p130 = scmp.eq.s32.totalorder %s24, 1
      %p131 = por %p129, %p130
      %p133 = scmp.ne.s32.totalorder %s118, %s132
      %p134 = scmp.eq.s32.totalorder %s24, 0
      %p135 = por %p133, %p134
      %s136 = ssub.s32 %s18, %s25
      %p137 = scmp.eq.s32.totalorder %s136, 0
      %s139 = sadd.s32 %s138, 1
      %s140 = scalar_select %p137, %s138, %s139
      %p143 = pneg %p137
      %p144 = scmp.eq.s32.totalorder %s18, 1
      %p145 = por %p143, %p144
      %p146 = scmp.ne.s32.totalorder %s138, %s141
      %p147 = scmp.eq.s32.totalorder %s18, 0
      %p148 = por %p146, %p147
      %p149 = scmp.ne.s32.totalorder %s138, %s141
      %p150 = scmp.eq.s32.totalorder %s23, 1
      %p151 = por %p149, %p150
      %p152 = scmp.ne.s32.totalorder %s141, %s142
      %p153 = scmp.eq.s32.totalorder %s23, 0
      %p154 = por %p152, %p153
      %p155 = scmp.ne.s32.totalorder %s141, %s142
      %p156 = scmp.eq.s32.totalorder %s24, 1
      %p157 = por %p155, %p156
      %p159 = scmp.ne.s32.totalorder %s142, %s158
      %p160 = scmp.eq.s32.totalorder %s24, 0
      %p161 = por %p159, %p160
      %p162 = scmp.le.s32.totalorder 1, %s18
      %p163 = scmp.lt.s32.totalorder %s18, 3
      %p164 = pnand %p162, %p163
      %p165 = pneg %p164
      // Predicated region
      $region9: #{tpu_custom_call.1} parent=5 // pred_check
        _
      $region10: #{tpu_custom_call.1} parent=5 // pred_check_branch
        %167 = sbr.rel (%p164) target = $region12
      $region11: #{tpu_custom_call.1} parent=5 // pred_region
        %s168 = ssub.s32 %s18, 1
        // Predicated region
        $region13: #{tpu_custom_call.1} parent=11 // pred_check
          %p169 = pneg %p65
        $region14: #{tpu_custom_call.1} parent=11 // pred_check_branch
          %171 = sbr.rel (%p169) target = $region16
        $region15: #{tpu_custom_call.1} parent=11 // pred_region
          %173 = vsyncadd [#allocation6], 0
          %s174 = sshll.u32 %s1, 4
          %s175 = int_to_ptr.hbm [resolvable:$true] %s174
          %s176 = sshll.u32 [#allocation5], 4
          %s177 = int_to_ptr.vmem [resolvable:$true] %s176
          %182 = dma.hbm_to_vmem [thread:$0]  %s175, 512, %s177, [#allocation6], 128, 128, 8
        $region16: #{tpu_custom_call.1} parent=11 // pred_fallthru
          _
        // Predicated region
        $region17: #{tpu_custom_call.1} parent=11 // pred_check
          %p183 = pneg %p86
        $region18: #{tpu_custom_call.1} parent=11 // pred_check_branch
          %185 = sbr.rel (%p183) target = $region20
        $region19: #{tpu_custom_call.1} parent=11 // pred_region
          _
        $region20: #{tpu_custom_call.1} parent=11 // pred_fallthru
          _
        // Predicated region
        $region21: #{tpu_custom_call.1} parent=11 // pred_check
          %p186 = pneg %p107
        $region22: #{tpu_custom_call.1} parent=11 // pred_check_branch
          %188 = sbr.rel (%p186) target = $region24
        $region23: #{tpu_custom_call.1} parent=11 // pred_region
          %190 = vsyncadd [#allocation6], 0
          %s191 = sshll.u32 %s3, 4
          %s192 = int_to_ptr.hbm [resolvable:$true] %s191
          %s193 = sshll.u32 [#allocation7], 4
          %s194 = int_to_ptr.vmem [resolvable:$true] %s193
          %199 = dma.hbm_to_vmem [thread:$0]  %s192, 512, %s194, [#allocation6], 128, 128, 8
        $region24: #{tpu_custom_call.1} parent=11 // pred_fallthru
          _
        // Predicated region
        $region25: #{tpu_custom_call.1} parent=11 // pred_check
          %p200 = pneg %p128
        $region26: #{tpu_custom_call.1} parent=11 // pred_check_branch
          %202 = sbr.rel (%p200) target = $region28
        $region27: #{tpu_custom_call.1} parent=11 // pred_region
          _
        $region28: #{tpu_custom_call.1} parent=11 // pred_fallthru
          _
      $region12: #{tpu_custom_call.1} parent=5 // pred_fallthru
        _
      %p203 = scmp.lt.s32.totalorder %s18, 2
      // Predicated region
      $region29: #{tpu_custom_call.1} parent=5 // pred_check
        %p204 = pneg %p203
      $region30: #{tpu_custom_call.1} parent=5 // pred_check_branch
        %206 = sbr.rel (%p204) target = $region32
      $region31: #{tpu_custom_call.1} parent=5 // pred_region
        // Predicated region
        $region33: #{tpu_custom_call.1} parent=31 // pred_check
          %p207 = pneg %p38
        $region34: #{tpu_custom_call.1} parent=31 // pred_check_branch
          %209 = sbr.rel (%p207) target = $region36
        $region35: #{tpu_custom_call.1} parent=31 // pred_region
          %s210 = sand.u32 %s28, 1
          %s211 = scalar_lea.sflag [#allocation3], %s210
          %s212 = sand.u32 %s28, 1
          %s213 = smul.addr %s212, 8
          %s214 = scalar_lea.vmem [#allocation2], %s213
          %216 = vsyncadd %s211, 0
          %s217 = smul.addr %s18, 8
          %s218 = scalar_lea.hbm %s0, %s217
          %s220 = sshll.u32 %s218, 4
          %s221 = int_to_ptr.hbm [resolvable:$true] %s220
          %s222 = sshll.u32 %s214, 4
          %s223 = int_to_ptr.vmem [resolvable:$true] %s222
          %225 = dma.hbm_to_vmem [thread:$0]  %s221, 128, %s223, %s211
        $region36: #{tpu_custom_call.1} parent=31 // pred_fallthru
          _
      $region32: #{tpu_custom_call.1} parent=5 // pred_fallthru
        _
      %p226 = scmp.le.s32.totalorder 1, %s18
      %p227 = scmp.lt.s32.totalorder %s18, 3
      %p228 = pnand %p226, %p227
      %p229 = pneg %p228
      // Predicated region
      $region37: #{tpu_custom_call.1} parent=5 // pred_check
        _
      $region38: #{tpu_custom_call.1} parent=5 // pred_check_branch
        %231 = sbr.rel (%p228) target = $region40
      $region39: #{tpu_custom_call.1} parent=5 // pred_region
        %s232 = ssub.s32 %s18, 1
        %s233 = sand.u32 %s31, 1
        %s234 = scalar_lea.sflag [#allocation3], %s233
        %s235 = sand.u32 %s31, 1
        %s236 = smul.addr %s235, 8
        %s237 = scalar_lea.vmem [#allocation2], %s236
        // Predicated region
        $region41: #{tpu_custom_call.1} parent=39 // pred_check
          %p238 = pneg %p44
        $region42: #{tpu_custom_call.1} parent=39 // pred_check_branch
          %240 = sbr.rel (%p238) target = $region44
        $region43: #{tpu_custom_call.1} parent=39 // pred_region
          %242 = dma.done %s234, 128
        $region44: #{tpu_custom_call.1} parent=39 // pred_fallthru
          _
        // Predicated region
        $region45: #{tpu_custom_call.1} parent=39 // pred_check
          %p243 = pneg %p65
        $region46: #{tpu_custom_call.1} parent=39 // pred_check_branch
          %245 = sbr.rel (%p243) target = $region48
        $region47: #{tpu_custom_call.1} parent=39 // pred_region
          %247 = dma.done [#allocation6], 512
        $region48: #{tpu_custom_call.1} parent=39 // pred_fallthru
          _
        // Predicated region
        $region49: #{tpu_custom_call.1} parent=39 // pred_check
          %p248 = pneg %p107
        $region50: #{tpu_custom_call.1} parent=39 // pred_check_branch
          %250 = sbr.rel (%p248) target = $region52
        $region51: #{tpu_custom_call.1} parent=39 // pred_region
          %252 = dma.done [#allocation6], 512
        $region52: #{tpu_custom_call.1} parent=39 // pred_fallthru
          _
        %s253 = sand.u32 %s31, 1
        %s254 = scalar_lea.sflag [#allocation3], %s253
        %s255 = sand.u32 %s31, 1
        %s256 = smul.addr %s255, 8
        %s257 = scalar_lea.vmem [#allocation2], %s256
        %p258 = pneg %p44
        %p259 = pneg %p41
        %p260 = pneg %p65
        %p261 = pneg %p62
        %p262 = pneg %p86
        %p263 = pneg %p83
        %p264 = pneg %p107
        %p265 = pneg %p104
        %p266 = pneg %p128
        %p267 = pneg %p125
        %p268 = pneg %p154
        %p269 = pneg %p151
        %s270 = sand.u32 %s141, 1
        %s271 = scalar_lea.sflag [#allocation4], %s270
        %s272 = sand.u32 %s141, 1
        %s273 = smul.addr %s272, 8
        %s274 = scalar_lea.vmem [#allocation8], %s273
        %v275 = vld [vmem:[%s237] sm:$0xff]
        %v276 = vld [vmem:[#allocation5] sm:$0xff]
        %v277 = vld [vmem:[#allocation5 + $0x8] sm:$0xff]
        %v278 = vld [vmem:[#allocation5 + $0x10] sm:$0xff]
        %v279 = vld [vmem:[#allocation5 + $0x18] sm:$0xff]
        %v280 = vld [vmem:[%s2] sm:$0x1]
        %v282 = vperm.slane %v280, 0
        %vm284 = vcmask 261120
        %v286 = vsel %vm284, %v275, 0
        %288 = vmatpush.msra.mxu0 0.0
        %289 = vmatpush.msra.mxu0 0.0
        %290 = vmatpush.msra.mxu0 0.0
        %291 = vmatpush.msra.mxu0 0.0
        %292 = vmatpush.msra.mxu0 0.0
        %293 = vmatpush.msra.mxu0 0.0
        %294 = vmatpush.msra.mxu0 0.0
        %295 = vmatpush.msra.mxu0 0.0
        %296 = vmatpush.msra.mxu0 0.0
        %297 = vmatpush.msra.mxu0 0.0
        %298 = vmatpush.msra.mxu0 0.0
        %299 = vmatpush.msra.mxu0 0.0
        %300 = vmatpush.msra.mxu0 %v279
        %301 = vmatpush.msra.mxu0 %v278
        %302 = vmatpush.msra.mxu0 %v277
        %303 = vmatpush.msra.mxu0 %v276
        %304 = vmatmul.f32.gmra.mxu0 %v286
        %v305 = vpop.f32.mrf.mxu0
        %v306 = vadd.f32 %v282, %v305
        %307 = vdwg.mxu0
        %309 = vrot.lane.b32.xlu0 %v306, 120
        %v310 = vpop.permute.xlu0 %309
        %312 = vrot.lane.b32.xlu0 %v306, 112
        %v313 = vpop.permute.xlu0 %312
        %315 = vrot.lane.b32.xlu0 %v306, 104
        %v316 = vpop.permute.xlu0 %315
        %v318 = vmul.f32 %v306, 0.35355338
        %v319 = vmul.f32 %v310, 0.35355338
        %v320 = vmul.f32 %v313, 0.35355338
        %v321 = vmul.f32 %v316, 0.35355338
        %322 = vrot.lane.b32.xlu0 %v306, 96
        %v323 = vpop.permute.xlu0 %322
        %vm324 = vcmask 64512
        %v326 = vsel %vm324, %v318, 0
        %v328 = vsel %vm324, %v323, 0
        %330 = vmatpush.xpose.msra.mxu0 0.0
        %331 = vmatpush.xpose.msra.mxu0 0.0
        %332 = vmatpush.xpose.msra.mxu0 0.0
        %333 = vmatpush.xpose.msra.mxu0 0.0
        %334 = vmatpush.xpose.msra.mxu0 0.0
        %335 = vmatpush.xpose.msra.mxu0 0.0
        %336 = vmatpush.xpose.msra.mxu0 0.0
        %337 = vmatpush.xpose.msra.mxu0 0.0
        %338 = vmatpush.xpose.msra.mxu0 0.0
        %339 = vmatpush.xpose.msra.mxu0 0.0
        %340 = vmatpush.xpose.msra.mxu0 0.0
        %341 = vmatpush.xpose.msra.mxu0 0.0
        %342 = vmatpush.xpose.msra.mxu0 0.0
        %343 = vmatpush.xpose.msra.mxu0 0.0
        %344 = vmatpush.xpose.msra.mxu0 0.0
        %345 = vmatpush.xpose.msra.mxu0 %v328
        %346 = vmatmul.f32.gmra.mxu0 %v326
        %v347 = vpop.f32.mrf.mxu0
        %v348 = vadd.f32 0.0, %v347
        %349 = vdwg.mxu0
        %350 = vrot.lane.b32.xlu0 %v310, 96
        %v351 = vpop.permute.xlu0 %350
        %v353 = vsel %vm324, %v319, 0
        %v355 = vsel %vm324, %v351, 0
        %357 = vmatpush.xpose.msra.mxu0 0.0
        %358 = vmatpush.xpose.msra.mxu0 0.0
        %359 = vmatpush.xpose.msra.mxu0 0.0
        %360 = vmatpush.xpose.msra.mxu0 0.0
        %361 = vmatpush.xpose.msra.mxu0 0.0
        %362 = vmatpush.xpose.msra.mxu0 0.0
        %363 = vmatpush.xpose.msra.mxu0 0.0
        %364 = vmatpush.xpose.msra.mxu0 0.0
        %365 = vmatpush.xpose.msra.mxu0 0.0
        %366 = vmatpush.xpose.msra.mxu0 0.0
        %367 = vmatpush.xpose.msra.mxu0 0.0
        %368 = vmatpush.xpose.msra.mxu0 0.0
        %369 = vmatpush.xpose.msra.mxu0 0.0
        %370 = vmatpush.xpose.msra.mxu0 0.0
        %371 = vmatpush.xpose.msra.mxu0 0.0
        %372 = vmatpush.xpose.msra.mxu0 %v355
        %373 = vmatmul.f32.gmra.mxu0 %v353
        %v374 = vpop.f32.mrf.mxu0
        %v375 = vadd.f32 0.0, %v374
        %376 = vdwg.mxu0
        %377 = vrot.lane.b32.xlu0 %v313, 96
        %v378 = vpop.permute.xlu0 %377
        %v380 = vsel %vm324, %v320, 0
        %v382 = vsel %vm324, %v378, 0
        %384 = vmatpush.xpose.msra.mxu0 0.0
        %385 = vmatpush.xpose.msra.mxu0 0.0
        %386 = vmatpush.xpose.msra.mxu0 0.0
        %387 = vmatpush.xpose.msra.mxu0 0.0
        %388 = vmatpush.xpose.msra.mxu0 0.0
        %389 = vmatpush.xpose.msra.mxu0 0.0
        %390 = vmatpush.xpose.msra.mxu0 0.0
        %391 = vmatpush.xpose.msra.mxu0 0.0
        %392 = vmatpush.xpose.msra.mxu0 0.0
        %393 = vmatpush.xpose.msra.mxu0 0.0
        %394 = vmatpush.xpose.msra.mxu0 0.0
        %395 = vmatpush.xpose.msra.mxu0 0.0
        %396 = vmatpush.xpose.msra.mxu0 0.0
        %397 = vmatpush.xpose.msra.mxu0 0.0
        %398 = vmatpush.xpose.msra.mxu0 0.0
        %399 = vmatpush.xpose.msra.mxu0 %v382
        %400 = vmatmul.f32.gmra.mxu0 %v380
        %v401 = vpop.f32.mrf.mxu0
        %v402 = vadd.f32 0.0, %v401
        %403 = vdwg.mxu0
        %404 = vrot.lane.b32.xlu0 %v316, 96
        %v405 = vpop.permute.xlu0 %404
        %v407 = vsel %vm324, %v321, 0
        %v409 = vsel %vm324, %v405, 0
        %411 = vmatpush.xpose.msra.mxu0 0.0
        %412 = vmatpush.xpose.msra.mxu0 0.0
        %413 = vmatpush.xpose.msra.mxu0 0.0
        %414 = vmatpush.xpose.msra.mxu0 0.0
        %415 = vmatpush.xpose.msra.mxu0 0.0
        %416 = vmatpush.xpose.msra.mxu0 0.0
        %417 = vmatpush.xpose.msra.mxu0 0.0
        %418 = vmatpush.xpose.msra.mxu0 0.0
        %419 = vmatpush.xpose.msra.mxu0 0.0
        %420 = vmatpush.xpose.msra.mxu0 0.0
        %421 = vmatpush.xpose.msra.mxu0 0.0
        %422 = vmatpush.xpose.msra.mxu0 0.0
        %423 = vmatpush.xpose.msra.mxu0 0.0
        %424 = vmatpush.xpose.msra.mxu0 0.0
        %425 = vmatpush.xpose.msra.mxu0 0.0
        %426 = vmatpush.xpose.msra.mxu0 %v409
        %427 = vmatmul.f32.gmra.mxu0 %v407
        %v428 = vpop.f32.mrf.mxu0
        %v429 = vadd.f32 0.0, %v428
        %430 = vdwg.mxu0
        %v431 = vsel %vm324, %v348, -inf
        %432 = vmax.xlane.f32.xlu0 %v431
        %v433 = vpop.xlane.xlu0 %432
        %v434 = vsel %vm324, %v375, -inf
        %435 = vmax.xlane.f32.xlu0 %v434
        %v436 = vpop.xlane.xlu0 %435
        %v437 = vsel %vm324, %v402, -inf
        %438 = vmax.xlane.f32.xlu0 %v437
        %v439 = vpop.xlane.xlu0 %438
        %v440 = vsel %vm324, %v429, -inf
        %441 = vmax.xlane.f32.xlu0 %v440
        %v442 = vpop.xlane.xlu0 %441
        %v443 = vsub.f32 %v348, %v433
        %v444 = vsub.f32 %v375, %v436
        %v445 = vsub.f32 %v402, %v439
        %v446 = vsub.f32 %v429, %v442
        %v447 = vmul.f32 %v443, 1.442695
        %v448 = vpow.pop %v447
        %v449 = vmul.f32 %v444, 1.442695
        %v450 = vpow.pop %v449
        %v451 = vmul.f32 %v445, 1.442695
        %v452 = vpow.pop %v451
        %v453 = vmul.f32 %v446, 1.442695
        %v454 = vpow.pop %v453
        %v455 = vsel %vm324, %v448, 0.0
        %456 = vadd.xlane.f32.xlu0 %v455
        %v457 = vpop.xlane.xlu0 %456
        %v458 = vsel %vm324, %v450, 0.0
        %459 = vadd.xlane.f32.xlu0 %v458
        %v460 = vpop.xlane.xlu0 %459
        %v461 = vsel %vm324, %v452, 0.0
        %462 = vadd.xlane.f32.xlu0 %v461
        %v463 = vpop.xlane.xlu0 %462
        %v464 = vsel %vm324, %v454, 0.0
        %465 = vadd.xlane.f32.xlu0 %v464
        %v466 = vpop.xlane.xlu0 %465
        %v467 = vrcp.pop %v457
        %v468 = vrcp.pop %v460
        %v469 = vrcp.pop %v463
        %v470 = vrcp.pop %v466
        %v471 = vmul.f32 %v448, %v467
        %v472 = vmul.f32 %v450, %v468
        %v473 = vmul.f32 %v452, %v469
        %v474 = vmul.f32 %v454, %v470
        %475 = vrot.lane.b32.xlu0 %v306, 64
        %v476 = vpop.permute.xlu0 %475
        %v479 = vsel %vm324, %v471, 0
        %481 = vmatpush.msra.mxu0 0.0
        %482 = vmatpush.msra.mxu0 0.0
        %483 = vmatpush.msra.mxu0 0.0
        %484 = vmatpush.msra.mxu0 0.0
        %485 = vmatpush.msra.mxu0 0.0
        %486 = vmatpush.msra.mxu0 0.0
        %487 = vmatpush.msra.mxu0 0.0
        %488 = vmatpush.msra.mxu0 0.0
        %489 = vmatpush.msra.mxu0 0.0
        %490 = vmatpush.msra.mxu0 0.0
        %491 = vmatpush.msra.mxu0 0.0
        %492 = vmatpush.msra.mxu0 0.0
        %493 = vmatpush.msra.mxu0 0.0
        %494 = vmatpush.msra.mxu0 0.0
        %495 = vmatpush.msra.mxu0 0.0
        %496 = vmatpush.msra.mxu0 %v476
        %497 = vmatmul.f32.gmra.mxu0 %v479
        %v498 = vpop.f32.mrf.mxu0
        %v499 = vadd.f32 0.0, %v498
        %500 = vdwg.mxu0
        %501 = vrot.lane.b32.xlu0 %v310, 64
        %v502 = vpop.permute.xlu0 %501
        %v505 = vsel %vm324, %v472, 0
        %507 = vmatpush.msra.mxu0 0.0
        %508 = vmatpush.msra.mxu0 0.0
        %509 = vmatpush.msra.mxu0 0.0
        %510 = vmatpush.msra.mxu0 0.0
        %511 = vmatpush.msra.mxu0 0.0
        %512 = vmatpush.msra.mxu0 0.0
        %513 = vmatpush.msra.mxu0 0.0
        %514 = vmatpush.msra.mxu0 0.0
        %515 = vmatpush.msra.mxu0 0.0
        %516 = vmatpush.msra.mxu0 0.0
        %517 = vmatpush.msra.mxu0 0.0
        %518 = vmatpush.msra.mxu0 0.0
        %519 = vmatpush.msra.mxu0 0.0
        %520 = vmatpush.msra.mxu0 0.0
        %521 = vmatpush.msra.mxu0 0.0
        %522 = vmatpush.msra.mxu0 %v502
        %523 = vmatmul.f32.gmra.mxu0 %v505
        %v524 = vpop.f32.mrf.mxu0
        %v525 = vadd.f32 0.0, %v524
        %526 = vdwg.mxu0
        %527 = vrot.lane.b32.xlu0 %v313, 64
        %v528 = vpop.permute.xlu0 %527
        %v531 = vsel %vm324, %v473, 0
        %533 = vmatpush.msra.mxu0 0.0
        %534 = vmatpush.msra.mxu0 0.0
        %535 = vmatpush.msra.mxu0 0.0
        %536 = vmatpush.msra.mxu0 0.0
        %537 = vmatpush.msra.mxu0 0.0
        %538 = vmatpush.msra.mxu0 0.0
        %539 = vmatpush.msra.mxu0 0.0
        %540 = vmatpush.msra.mxu0 0.0
        %541 = vmatpush.msra.mxu0 0.0
        %542 = vmatpush.msra.mxu0 0.0
        %543 = vmatpush.msra.mxu0 0.0
        %544 = vmatpush.msra.mxu0 0.0
        %545 = vmatpush.msra.mxu0 0.0
        %546 = vmatpush.msra.mxu0 0.0
        %547 = vmatpush.msra.mxu0 0.0
        %548 = vmatpush.msra.mxu0 %v528
        %549 = vmatmul.f32.gmra.mxu0 %v531
        %v550 = vpop.f32.mrf.mxu0
        %v551 = vadd.f32 0.0, %v550
        %552 = vdwg.mxu0
        %553 = vrot.lane.b32.xlu0 %v316, 64
        %v554 = vpop.permute.xlu0 %553
        %v557 = vsel %vm324, %v474, 0
        %559 = vmatpush.msra.mxu0 0.0
        %560 = vmatpush.msra.mxu0 0.0
        %561 = vmatpush.msra.mxu0 0.0
        %562 = vmatpush.msra.mxu0 0.0
        %563 = vmatpush.msra.mxu0 0.0
        %564 = vmatpush.msra.mxu0 0.0
        %565 = vmatpush.msra.mxu0 0.0
        %566 = vmatpush.msra.mxu0 0.0
        %567 = vmatpush.msra.mxu0 0.0
        %568 = vmatpush.msra.mxu0 0.0
        %569 = vmatpush.msra.mxu0 0.0
        %570 = vmatpush.msra.mxu0 0.0
        %571 = vmatpush.msra.mxu0 0.0
        %572 = vmatpush.msra.mxu0 0.0
        %573 = vmatpush.msra.mxu0 0.0
        %574 = vmatpush.msra.mxu0 %v554
        %575 = vmatmul.f32.gmra.mxu0 %v557
        %v576 = vpop.f32.mrf.mxu0
        %v577 = vadd.f32 0.0, %v576
        %578 = vdwg.mxu0
        %580 = vrot.lane.b32.xlu0 %v525, 8
        %v581 = vpop.permute.xlu0 %580
        %584 = vrot.lane.b32.xlu0 %v551, 16
        %v585 = vpop.permute.xlu0 %584
        %588 = vrot.lane.b32.xlu0 %v577, 24
        %v589 = vpop.permute.xlu0 %588
        %v591 = vsel %vm324, %v499, %v581
        %vm592 = vcmask 130048
        %v593 = vsel %vm592, %v591, %v585
        %vm594 = vcmask 195584
        %v595 = vsel %vm594, %v593, %v589
        %v596 = vld [vmem:[#allocation7] sm:$0xff]
        %v597 = vld [vmem:[#allocation7 + $0x8] sm:$0xff]
        %v598 = vld [vmem:[#allocation7 + $0x10] sm:$0xff]
        %v599 = vld [vmem:[#allocation7 + $0x18] sm:$0xff]
        %v600 = vld [vmem:[%s4] sm:$0x1]
        %v602 = vperm.slane %v600, 0
        %v605 = vsel %vm284, %v595, 0
        %607 = vmatpush.msra.mxu0 0.0
        %608 = vmatpush.msra.mxu0 0.0
        %609 = vmatpush.msra.mxu0 0.0
        %610 = vmatpush.msra.mxu0 0.0
        %611 = vmatpush.msra.mxu0 0.0
        %612 = vmatpush.msra.mxu0 0.0
        %613 = vmatpush.msra.mxu0 0.0
        %614 = vmatpush.msra.mxu0 0.0
        %615 = vmatpush.msra.mxu0 0.0
        %616 = vmatpush.msra.mxu0 0.0
        %617 = vmatpush.msra.mxu0 0.0
        %618 = vmatpush.msra.mxu0 0.0
        %619 = vmatpush.msra.mxu0 %v599
        %620 = vmatpush.msra.mxu0 %v598
        %621 = vmatpush.msra.mxu0 %v597
        %622 = vmatpush.msra.mxu0 %v596
        %623 = vmatmul.f32.gmra.mxu0 %v605
        %v624 = vpop.f32.mrf.mxu0
        %v625 = vadd.f32 %v602, %v624
        %626 = vdwg.mxu0
        %627 = vst.msk [vmem:[%s274] sm:$0xff] %vm284, %v625
        %s628 = sand.u32 %s141, 1
        %s629 = scalar_lea.sflag [#allocation4], %s628
        %s630 = sand.u32 %s141, 1
        %s631 = smul.addr %s630, 8
        %s632 = scalar_lea.vmem [#allocation8], %s631
        // Predicated region
        $region53: #{tpu_custom_call.1} parent=39 // pred_check
          %p633 = pneg %p151
        $region54: #{tpu_custom_call.1} parent=39 // pred_check_branch
          %635 = sbr.rel (%p633) target = $region56
        $region55: #{tpu_custom_call.1} parent=39 // pred_region
          %637 = vsyncadd %s629, 0
          %s638 = smul.addr %s23, 8
          %s639 = scalar_lea.hbm %s5, %s638
          %s641 = sshll.u32 %s632, 4
          %s642 = int_to_ptr.vmem [resolvable:$true] %s641
          %s643 = sshll.u32 %s639, 4
          %s644 = int_to_ptr.hbm [resolvable:$true] %s643
          %646 = dma.vmem_to_hbm [thread:$0]  %s642, 128, %s644, %s629
        $region56: #{tpu_custom_call.1} parent=39 // pred_fallthru
          _
      $region40: #{tpu_custom_call.1} parent=5 // pred_fallthru
        _
      %p647 = scmp.le.s32.totalorder 2, %s18
      // Predicated region
      $region57: #{tpu_custom_call.1} parent=5 // pred_check
        %p648 = pneg %p647
      $region58: #{tpu_custom_call.1} parent=5 // pred_check_branch
        %650 = sbr.rel (%p648) target = $region60
      $region59: #{tpu_custom_call.1} parent=5 // pred_region
        %s651 = ssub.s32 %s18, 2
        // Predicated region
        $region61: #{tpu_custom_call.1} parent=59 // pred_check
          %p652 = pneg %p157
        $region62: #{tpu_custom_call.1} parent=59 // pred_check_branch
          %654 = sbr.rel (%p652) target = $region64
        $region63: #{tpu_custom_call.1} parent=59 // pred_region
          %s655 = sand.u32 %s142, 1
          %s656 = scalar_lea.sflag [#allocation4], %s655
          %s657 = sand.u32 %s142, 1
          %s658 = smul.addr %s657, 8
          %s659 = scalar_lea.vmem [#allocation8], %s658
          %661 = dma.done %s656, 128
        $region64: #{tpu_custom_call.1} parent=59 // pred_fallthru
          _
      $region60: #{tpu_custom_call.1} parent=5 // pred_fallthru
        _
    $region6: #{tpu_custom_call.1} parent=1 // loop_footer
      %s22 = sadd.s32 1, %s18
    $region7: #{tpu_custom_call.1} parent=1 // loop_footer_branch
      %17 = sbr.rel target = $region3
    $region8: #{tpu_custom_call.1} parent=1 // loop_exit
      _
    %662 = vsyncpa [#allocation3], 1
    %s663 = scalar_lea.sflag [#allocation3], 1
    %664 = vsyncpa %s663, 1
    %665 = vsyncpa [#allocation6], 1
    %666 = vsyncpa [#allocation4], 1
    %s667 = scalar_lea.sflag [#allocation4], 1
    %668 = vsyncpa %s667, 1

</llo_original>
